<compile_context>
chip_gen: v5e
topology: v5e:2x2
jax: 0.10.0
libtpu: 0.0.40
codegen_flags: <defaults>
</compile_context>

<pallas_src>
import math

import jax
import jax.numpy as jnp
from jax import lax
from jax.experimental import pallas as pl
from jax.experimental.pallas import tpu as pltpu

# ------------------------- configuration -------------------------
BATCH = 2
C_IN = 3
C_IN_PAD = 8                 # pad 3 input channels so the block is not a sliver
SPATIAL = 16                 # feature-map / coordinate grid size (original 224)
C_FEAT = 32                  # backbone feature channels          (original 1024)
N_BOUND = 8                  # boundary points                    (original 80)
D_TOKEN = 2 * C_FEAT + 2     # token width                        (original 2050)
D_FFN = 32                   # transformer feed-forward width     (original 2048)
D_OUT = C_FEAT + 2           # output encoder width               (original 1026)
REFINE_NUM = 3
LN_EPS = 1e-5

HW = SPATIAL * SPATIAL
FEAT_TILE = 512              # rows per feature-extractor grid step

# 128-aligned ("lane-padded") layouts.
C_PAD = 128                  # padded token-group width (== C_FEAT at full size)
D_PAD = 2 * C_PAD + 128      # padded token width: [qf | bfeat | coords] groups
FFN_PAD = 128                # padded FFN width
OUT_PAD = 2 * C_PAD          # output-encoder width: [q_off group | b_off group]

ITER_PACKED_ORDER = ('ln_g', 'ln_b',
                     'wqkv', 'bqkv', 'wo', 'bo',
                     'n1_g', 'n1_b',
                     'w1', 'b1', 'w2', 'b2',
                     'n2_g', 'n2_b',
                     'wout', 'bout')


# ------------------------- Pallas kernels -------------------------
def _feat_kernel(x_ref, w_ref, b_ref, o_ref):
    # 1x1-conv stand-in feature extractor, channels-last:
    # (TILE, Cin_pad)bf16 @ (Cin_pad, Cfeat)bf16 -> f32
    o_ref[...] = (jnp.dot(x_ref[...], w_ref[...],
                          preferred_element_type=jnp.float32) + b_ref[...])


def _refine_kernel(pb_ref,                        # SMEM i32 (B*N*2,) scalar prefetch
                   pre_hbm, curr_hbm,             # HBM  f32 (B*HW, C_FEAT), pl.ANY
                   bound0_ref,                    # VMEM f32 (1, N, 128)
                   pe_ref,                        # VMEM f32 (N, D_PAD)
                   ln_g_ref, ln_b_ref,
                   wqkv_ref, bqkv_ref, wo_ref, bo_ref,
                   n1_g_ref, n1_b_ref,
                   w1_ref, b1_ref, w2_ref, b2_ref,
                   n2_g_ref, n2_b_ref,
                   wout_ref, bout_ref,
                   out_ref,                       # VMEM f32 (1, R, N, 128)
                   qf_buf, bf_buf,                # VMEM f32 (N, C_PAD) gather buffers
                   idx_vmem,                      # VMEM i32 (N, 128)
                   idx_smem,                      # SMEM i32 (N, 128)
                   tok_vmem,                      # VMEM f32 (N, D_PAD)
                   gsem, isem):                   # DMA semaphores (N,), (1,)
    """All REFINE_NUM refine iterations for ONE batch element (grid over batch)."""
    f32, bf16 = jnp.float32, jnp.bfloat16
    b = pl.program_id(0)
    row_base = b * HW

    def row_copy(src_hbm, flat, dst_buf, n):
        return pltpu.make_async_copy(
            src_hbm.at[pl.ds(flat, 1), pl.ds(0, C_FEAT)],
            dst_buf.at[pl.ds(n, 1), pl.ds(0, C_FEAT)],
            gsem.at[n])

    # Zero the gather buffers once so their padded lanes stay exactly 0.
    qf_buf[...] = jnp.zeros_like(qf_buf)
    bf_buf[...] = jnp.zeros_like(bf_buf)

    # ---- one-time query-feature gather from previous-frame features (HBM DMAs,
    #      addressed by the scalar-prefetched previous_boundary) ----
    for n in range(N_BOUND):
        base = (b * N_BOUND + n) * 2
        flat = row_base + pb_ref[base] * SPATIAL + pb_ref[base + 1]
        row_copy(pre_hbm, flat, qf_buf, n).start()
    for n in range(N_BOUND):
        row_copy(pre_hbm, 0, qf_buf, n).wait()

    qf = qf_buf[...]                  # (N, C_PAD) f32, real cols [0, C_FEAT)
    cb = bound0_ref[0]                # (N, 128)  f32, real cols [0, 2)

    # ---- hoist loop-invariant broadcasts out of the unrolled loop ----
    pe = pe_ref[...]
    ln_g = jnp.broadcast_to(ln_g_ref[...], (N_BOUND, D_PAD))
    ln_b = jnp.broadcast_to(ln_b_ref[...], (N_BOUND, D_PAD))
    n1_g = jnp.broadcast_to(n1_g_ref[...], (N_BOUND, D_PAD))
    n1_b = jnp.broadcast_to(n1_b_ref[...], (N_BOUND, D_PAD))
    n2_g = jnp.broadcast_to(n2_g_ref[...], (N_BOUND, D_PAD))
    n2_b = jnp.broadcast_to(n2_b_ref[...], (N_BOUND, D_PAD))
    bqkv = jnp.broadcast_to(bqkv_ref[...], (N_BOUND, 3 * D_PAD))
    bo = jnp.broadcast_to(bo_ref[...], (N_BOUND, D_PAD))
    b1 = jnp.broadcast_to(b1_ref[...], (N_BOUND, FFN_PAD))
    b2 = jnp.broadcast_to(b2_ref[...], (N_BOUND, D_PAD))
    bout = jnp.broadcast_to(bout_ref[...], (N_BOUND, OUT_PAD))

    inv_d = 1.0 / float(D_TOKEN)

    def layer_norm(x, g, bias):
        # Padded lanes of x are exactly 0, so sums over D_PAD == sums over the
        # real D_TOKEN columns; g/bias are 0 on padded lanes so padding stays 0.
        mu = jnp.sum(x, axis=-1, keepdims=True) * inv_d
        ex2 = jnp.sum(x * x, axis=-1, keepdims=True) * inv_d
        var = ex2 - mu * mu
        return (x - mu) * lax.rsqrt(var + LN_EPS) * g + bias

    for it in range(REFINE_NUM):
        # ---- boundary-feature row gather at int(curr_boundary) (HBM DMAs) ----
        for n in range(N_BOUND):
            if it == 0:
                base = (b * N_BOUND + n) * 2
                rr, cc = pb_ref[base], pb_ref[base + 1]
            else:
                rr, cc = idx_smem[n, 0], idx_smem[n, 1]
            flat = row_base + rr * SPATIAL + cc
            row_copy(curr_hbm, flat, bf_buf, n).start()
        for n in range(N_BOUND):
            row_copy(curr_hbm, 0, bf_buf, n).wait()

        # ---- assemble lane-padded tokens at 128-aligned column groups ----
        tok_vmem[:, 0:C_PAD] = qf
        tok_vmem[:, C_PAD:2 * C_PAD] = bf_buf[...]
        tok_vmem[:, 2 * C_PAD:D_PAD] = cb
        tokens = tok_vmem[...]

        # LayerNorm(tokens) then positional embedding (dropout = identity)
        x = layer_norm(tokens, ln_g, ln_b) + pe

        # ---- TransformerEncoderLayer (nhead=1, post-norm, ReLU FFN) ----
        # fused QKV projection; 1/sqrt(D_TOKEN) already folded into the Q block
        qkv = jnp.dot(x.astype(bf16), wqkv_ref[...],
                      preferred_element_type=f32) + bqkv
        q = qkv[:, 0:D_PAD].astype(bf16)
        k = qkv[:, D_PAD:2 * D_PAD].astype(bf16)
        v = qkv[:, 2 * D_PAD:3 * D_PAD].astype(bf16)

        scores = lax.dot_general(q, k, (((1,), (1,)), ((), ())),
                                 preferred_element_type=f32)        # (N, N)
        scores = scores - jnp.max(scores, axis=-1, keepdims=True)
        p = jnp.exp(scores)
        attn = p * pl.reciprocal(jnp.sum(p, axis=-1, keepdims=True), approx=True)

        a = jnp.dot(attn.astype(bf16), v, preferred_element_type=f32)
        a = jnp.dot(a.astype(bf16), wo_ref[...], preferred_element_type=f32) + bo
        x = layer_norm(x + a, n1_g, n1_b)

        h = jnp.maximum(jnp.dot(x.astype(bf16), w1_ref[...],
                                preferred_element_type=f32) + b1, 0.0)
        ff = jnp.dot(h.astype(bf16), w2_ref[...], preferred_element_type=f32) + b2
        x = layer_norm(x + ff, n2_g, n2_b)

        # ---- output encoder -> query-feature / boundary offsets ----
        out = jnp.dot(x.astype(bf16), wout_ref[...],
                      preferred_element_type=f32) + bout            # (N, OUT_PAD)
        qf = qf + out[:, 0:C_PAD]
        cb = jnp.clip(cb + out[:, C_PAD:OUT_PAD], 0.0, float(SPATIAL - 1))

        out_ref[0, it] = cb                                          # lane-dense store

        # ---- push int(curr_boundary) to SMEM to drive the next gather's DMAs ----
        if it + 1 < REFINE_NUM:
            idx_vmem[...] = cb.astype(jnp.int32)    # trunc-toward-zero == .long()
            cp = pltpu.make_async_copy(idx_vmem, idx_smem, isem.at[0])
            cp.start()
            cp.wait()


# ------------------------- wrappers -------------------------
def extract_features(frames, feat_w, feat_b):
    """NCHW frames -> channels-last (rows, C_FEAT) f32 features (1x1-conv stand-in)."""
    # TODO(synk): the frozen ResNet-50 backbone (res50_bone) is replaced by a
    #             1x1-conv stand-in; F.interpolate is an identity here since the
    #             spatial sizes already match.
    B, C, H, W = frames.shape
    rows = B * H * W
    x = jnp.transpose(frames, (0, 2, 3, 1)).reshape(rows, C)
    x = jnp.pad(x, ((0, 0), (0, C_IN_PAD - C))).astype(jnp.bfloat16)
    w = jnp.pad(feat_w, ((0, C_IN_PAD - C), (0, 0))).astype(jnp.bfloat16)
    return pl.pallas_call(
        _feat_kernel,
        grid=(rows // FEAT_TILE,),
        in_specs=[pl.BlockSpec((FEAT_TILE, C_IN_PAD), lambda i: (i, 0)),
                  pl.BlockSpec((C_IN_PAD, C_FEAT), lambda i: (0, 0)),
                  pl.BlockSpec((1, C_FEAT), lambda i: (0, 0))],
        out_specs=pl.BlockSpec((FEAT_TILE, C_FEAT), lambda i: (i, 0)),
        out_shape=jax.ShapeDtypeStruct((rows, C_FEAT), jnp.float32),
        compiler_params=pltpu.CompilerParams(dimension_semantics=("parallel",)),
    )(x, w, feat_b)


def run_refine(pre_flat, curr_flat, bound0_pad, pb_flat, pe_pad, packed):
    """One pallas_call for all refine iterations, grid over batch elements.

    Feature maps stay in HBM (row-DMA gathers); weights are loaded to VMEM once
    (constant index_maps).  TODO(synk): at original sizes raise vmem_limit_bytes
    per generation (~56-60 MB on v7x, ~96-110 MB on v6e/v5e) so the ~55 MB of
    packed bf16 weights stay resident.
    """
    weight_specs = [pl.BlockSpec(w.shape, lambda b, pb: (0, 0)) for w in packed]
    grid_spec = pltpu.PrefetchScalarGridSpec(
        num_scalar_prefetch=1,
        grid=(BATCH,),
        in_specs=[
            pl.BlockSpec(memory_space=pl.ANY),                        # pre feat (HBM)
            pl.BlockSpec(memory_space=pl.ANY),                        # curr feat (HBM)
            pl.BlockSpec((1, N_BOUND, 128), lambda b, pb: (b, 0, 0)),  # bound0 (padded)
            pl.BlockSpec((N_BOUND, D_PAD), lambda b, pb: (0, 0)),      # pos. encoding
            *weight_specs,
        ],
        out_specs=pl.BlockSpec((1, REFINE_NUM, N_BOUND, 128),
                               lambda b, pb: (b, 0, 0, 0)),
        scratch_shapes=[
            pltpu.VMEM((N_BOUND, C_PAD), jnp.float32),    # query-feature gather buf
            pltpu.VMEM((N_BOUND, C_PAD), jnp.float32),    # boundary-feature gather buf
            pltpu.VMEM((N_BOUND, 128), jnp.int32),        # int boundary indices (VMEM)
            pltpu.SMEM((N_BOUND, 128), jnp.int32),        # int boundary indices (SMEM)
            pltpu.VMEM((N_BOUND, D_PAD), jnp.float32),    # assembled token scratch
            pltpu.SemaphoreType.DMA((N_BOUND,)),
            pltpu.SemaphoreType.DMA((1,)),
        ],
    )
    return pl.pallas_call(
        _refine_kernel,
        grid_spec=grid_spec,
        out_shape=jax.ShapeDtypeStruct((BATCH, REFINE_NUM, N_BOUND, 128), jnp.float32),
        compiler_params=pltpu.CompilerParams(
            dimension_semantics=("parallel",),
            vmem_limit_bytes=32 * 1024 * 1024),
    )(pb_flat, pre_flat, curr_flat, bound0_pad, pe_pad, *packed)


# ------------------------- padding / packing helpers -------------------------
def pad_token_cols(a):
    """(..., D_TOKEN) -> (..., D_PAD): groups [qf|bfeat|coords] at 128-aligned cols."""
    out = jnp.zeros(a.shape[:-1] + (D_PAD,), a.dtype)
    out = out.at[..., 0:C_FEAT].set(a[..., 0:C_FEAT])
    out = out.at[..., C_PAD:C_PAD + C_FEAT].set(a[..., C_FEAT:2 * C_FEAT])
    out = out.at[..., 2 * C_PAD:2 * C_PAD + 2].set(a[..., 2 * C_FEAT:D_TOKEN])
    return out


def pad_token_rows(w):
    return jnp.swapaxes(pad_token_cols(jnp.swapaxes(w, 0, 1)), 0, 1)


def pad_out_cols(a):
    """(..., D_OUT) -> (..., OUT_PAD): [q_off group | b_off group], 128-aligned."""
    out = jnp.zeros(a.shape[:-1] + (OUT_PAD,), a.dtype)
    out = out.at[..., 0:C_FEAT].set(a[..., 0:C_FEAT])
    out = out.at[..., C_PAD:C_PAD + 2].set(a[..., C_FEAT:D_OUT])
    return out


def pad_last(a, new):
    return jnp.pad(a, [(0, 0)] * (a.ndim - 1) + [(0, new - a.shape[-1])])


def pad_first(a, new):
    return jnp.pad(a, [(0, new - a.shape[0])] + [(0, 0)] * (a.ndim - 1))


def pack_iter_weights(p):
    """Fuse q/k/v, fold 1/sqrt(D_TOKEN) into Q, pad to 128-aligned group layouts."""
    bf16 = jnp.bfloat16
    scale = 1.0 / math.sqrt(float(D_TOKEN))

    def tok2(w):
        return pad_token_rows(pad_token_cols(w))

    wqkv = jnp.concatenate([tok2(p['wq'] * scale), tok2(p['wk']), tok2(p['wv'])],
                           axis=1).astype(bf16)                        # (D_PAD, 3*D_PAD)
    bqkv = jnp.concatenate([pad_token_cols(p['bq'] * scale),
                            pad_token_cols(p['bk']),
                            pad_token_cols(p['bv'])], axis=1)          # (1, 3*D_PAD)
    packed = {
        'ln_g': pad_token_cols(p['ln_g']), 'ln_b': pad_token_cols(p['ln_b']),
        'wqkv': wqkv, 'bqkv': bqkv,
        'wo': tok2(p['wo']).astype(bf16), 'bo': pad_token_cols(p['bo']),
        'n1_g': pad_token_cols(p['n1_g']), 'n1_b': pad_token_cols(p['n1_b']),
        'w1': pad_last(pad_token_rows(p['w1']), FFN_PAD).astype(bf16),
        'b1': pad_last(p['b1'], FFN_PAD),
        'w2': pad_token_cols(pad_first(p['w2'], FFN_PAD)).astype(bf16),
        'b2': pad_token_cols(p['b2']),
        'n2_g': pad_token_cols(p['n2_g']), 'n2_b': pad_token_cols(p['n2_b']),
        'wout': pad_out_cols(pad_token_rows(p['wout'])).astype(bf16),
        'bout': pad_out_cols(p['bout']),
    }
    return tuple(packed[k] for k in ITER_PACKED_ORDER)


def make_pe(seq_len, dim):
    pos = jnp.arange(seq_len, dtype=jnp.float32)[:, None]
    div = jnp.exp(jnp.arange(0, dim, 2, dtype=jnp.float32)
                  * (-jnp.log(10000.0) / dim))
    pe = jnp.zeros((seq_len, dim), jnp.float32)
    pe = pe.at[:, 0::2].set(jnp.sin(pos * div))
    pe = pe.at[:, 1::2].set(jnp.cos(pos * div))
    return pe


def init_params(key):
    D, F, O = D_TOKEN, D_FFN, D_OUT
    shapes = {'feat_w': (C_IN, C_FEAT), 'feat_b': (1, C_FEAT),
              'wq': (D, D), 'bq': (1, D), 'wk': (D, D), 'bk': (1, D),
              'wv': (D, D), 'bv': (1, D), 'wo': (D, D), 'bo': (1, D),
              'w1': (D, F), 'b1': (1, F), 'w2': (F, D), 'b2': (1, D),
              'wout': (D, O), 'bout': (1, O)}
    names = sorted(shapes)
    keys = jax.random.split(key, len(names))
    params = {n: 0.05 * jax.random.normal(k, shapes[n], jnp.float32)
              for n, k in zip(names, keys)}
    for n in ('ln_g', 'n1_g', 'n2_g'):
        params[n] = jnp.ones((1, D), jnp.float32)
    for n in ('ln_b', 'n1_b', 'n2_b'):
        params[n] = jnp.zeros((1, D), jnp.float32)
    return params


def forward(previous_frame, current_frame, previous_boundary, params, pe_full):
    # Both frames through the backbone stand-in in ONE fused pallas_call.
    feats = extract_features(
        jnp.concatenate([previous_frame, current_frame], axis=0),
        params['feat_w'], params['feat_b'])                 # (2*B*HW, C_FEAT) f32
    pre_flat = feats[:BATCH * HW]
    curr_flat = feats[BATCH * HW:]
    # TODO(synk): at original sizes store the feature maps as bf16 (u32-paired
    #             rows) to halve HBM traffic of the gather DMAs.

    pb_flat = previous_boundary.astype(jnp.int32).reshape(-1)      # (B*N*2,) SMEM
    bound0_pad = jnp.zeros((BATCH, N_BOUND, 128), jnp.float32)
    bound0_pad = bound0_pad.at[:, :, 0:2].set(previous_boundary.astype(jnp.float32))
    pe_pad = pad_token_cols(pe_full[:N_BOUND])                     # (N, D_PAD)

    packed = pack_iter_weights(params)
    res = run_refine(pre_flat, curr_flat, bound0_pad, pb_flat, pe_pad, packed)
    # res: (B, REFINE_NUM, N, 128) lane-padded; real boundary coords in cols 0:2.
    return [res[:, r, :, 0:2] for r in range(REFINE_NUM)]


# ------------------------- main -------------------------
if __name__ == "__main__":
    key = jax.random.PRNGKey(0)
    k1, k2, k3, kp = jax.random.split(key, 4)
    previous_frame = jax.random.normal(k1, (BATCH, C_IN, SPATIAL, SPATIAL), jnp.float32)
    current_frame = jax.random.normal(k2, (BATCH, C_IN, SPATIAL, SPATIAL), jnp.float32)
    previous_boundary = jax.random.randint(
        k3, (BATCH, N_BOUND, 2), 0, SPATIAL, dtype=jnp.int32)

    params = init_params(kp)
    pe_full = make_pe(1024, D_TOKEN)

    results = forward(previous_frame, current_frame, previous_boundary, params, pe_full)
    jax.block_until_ready(results)
    assert len(results) == REFINE_NUM
    assert all(r.shape == (BATCH, N_BOUND, 2) for r in results)
    print("KERNEL_OK")
</pallas_src>

<mosaic_0001>
module attributes {stable_mosaic.version = 11 : i64} {
  func.func @_feat_kernel(%arg0: i32, %arg1: memref<512x8xbf16, #tpu.memory_space<vmem>>, %arg2: memref<8x32xbf16, #tpu.memory_space<vmem>>, %arg3: memref<1x32xf32, #tpu.memory_space<vmem>>, %arg4: memref<512x32xf32, #tpu.memory_space<vmem>>) attributes {dimension_semantics = [#tpu.dimension_semantics<parallel>], iteration_bounds = array<i64: 2>, scalar_prefetch = 0 : i64, scratch_operands = 0 : i64, tpu.core_type = #tpu.core_type<tc>, window_params = [{transform_indices = @transform_0, window_bounds = array<i64: 512, 8>}, {pipeline_mode = #tpu.pipeline_mode<synchronous>, transform_indices = @transform_1, window_bounds = array<i64: 8, 32>}, {pipeline_mode = #tpu.pipeline_mode<synchronous>, transform_indices = @transform_2, window_bounds = array<i64: 1, 32>}, {transform_indices = @transform_3, window_bounds = array<i64: 512, 32>}]} {
    %c0 = arith.constant 0 : index
    %c0_0 = arith.constant 0 : index
    %0 = vector.load %arg1[%c0, %c0_0] : memref<512x8xbf16, #tpu.memory_space<vmem>>, vector<512x8xbf16>
    %c0_1 = arith.constant 0 : index
    %c0_2 = arith.constant 0 : index
    %1 = vector.load %arg2[%c0_1, %c0_2] : memref<8x32xbf16, #tpu.memory_space<vmem>>, vector<8x32xbf16>
    %cst = arith.constant dense<0.000000e+00> : vector<512x32xf32>
    %2 = tpu.matmul %0, %1, %cst {dimension_numbers = #tpu.dot_dimension_numbers<[1], [0], [0], [1], [0, 0, 1, 1], [], []>} : vector<512x8xbf16>, vector<8x32xbf16>, vector<512x32xf32> -> vector<512x32xf32>
    %c0_3 = arith.constant 0 : index
    %c0_4 = arith.constant 0 : index
    %3 = vector.load %arg3[%c0_3, %c0_4] : memref<1x32xf32, #tpu.memory_space<vmem>>, vector<1x32xf32>
    %4 = vector.broadcast %3 : vector<1x32xf32> to vector<512x32xf32>
    %5 = arith.addf %2, %4 : vector<512x32xf32>
    %c0_5 = arith.constant 0 : index
    %c0_6 = arith.constant 0 : index
    %6 = vector.load %arg4[%c0_5, %c0_6] : memref<512x32xf32, #tpu.memory_space<vmem>>, vector<512x32xf32>
    tpu.vector_store %arg4[%c0_5, %c0_6], %5 {strides = array<i32>} : memref<512x32xf32, #tpu.memory_space<vmem>>, vector<512x32xf32>,
    return
  }
  func.func @transform_0(%arg0: i32) -> (i32, i32) {
    %c0_i32 = arith.constant 0 : i32
    %c0_i32_0 = arith.constant 0 : i32
    return %arg0, %c0_i32 : i32, i32
  }
  func.func @transform_1(%arg0: i32) -> (i32, i32) {
    %c0_i32 = arith.constant 0 : i32
    %c0_i32_0 = arith.constant 0 : i32
    %c0_i32_1 = arith.constant 0 : i32
    return %c0_i32, %c0_i32_0 : i32, i32
  }
  func.func @transform_2(%arg0: i32) -> (i32, i32) {
    %c0_i32 = arith.constant 0 : i32
    %c0_i32_0 = arith.constant 0 : i32
    %c0_i32_1 = arith.constant 0 : i32
    return %c0_i32, %c0_i32_0 : i32, i32
  }
  func.func @transform_3(%arg0: i32) -> (i32, i32) {
    %c0_i32 = arith.constant 0 : i32
    %c0_i32_0 = arith.constant 0 : i32
    return %arg0, %c0_i32 : i32, i32
  }
}

</mosaic_0001>

<llo_original>
// kernel: tpu_custom_call.1
$region0: #{tpu_custom_call.1}
  #allocation0 [shape = 'u32[]', space=smem, size = 0x4, offset = 0x4, fixed_abs, tag = 'smem constant byte address 0x4 - core index']
  #allocation1 [shape = 'u32[72,128]{1,0:T(1,128)}', space=vmem, size = 0x9000, scoped, tag = 'internal scratch']
  %s0 = inlined_call_operand.vmem [shape: bf16[1024,8], index: 0, kind: input, shape index: {}]
  %s1 = inlined_call_operand.vmem [shape: bf16[8,32], index: 1, kind: input, shape index: {}]
  %s2 = inlined_call_operand.vmem [shape: f32[1,32], index: 2, kind: input, shape index: {}]
  %s3 = inlined_call_operand.vmem [shape: f32[1024,32], index: 3, kind: output, shape index: {}]
  %s4 = sld [smem:[#allocation0]]
  $region45: #{tpu_custom_call.1} parent=0
    _
  %s6 = ssub.s32 1, %s4
  %s7 = scalar_select 0, %s6, %s4
  loop: start=0, step=1, limit=4
  $region2: #{tpu_custom_call.1} parent=0 // loop_pre_header
    _
  $region3: #{tpu_custom_call.1} parent=0 // loop_header
    %s9 = sphi 0, %s13
    %p10 = scmp.ge.s32.totalorder %s9, 4
    %s19 = sphi 0, %s21
    %s22 = sphi 0, %s19
    %s23 = sphi 0, %s22
    %s39 = sphi 0, %s23
    %s43 = sphi 0, %s43
    %s45 = sphi 0, %s43
    %s46 = sphi 0, %s45
    %s60 = sphi 0, %s46
    %s64 = sphi 0, %s64
    %s66 = sphi 0, %s64
    %s67 = sphi 0, %s66
    %s81 = sphi 0, %s67
    %s87 = sphi 0, %s89
    %s90 = sphi 0, %s87
    %s91 = sphi 0, %s90
    %s107 = sphi 0, %s91
  $region4: #{tpu_custom_call.1} parent=0 // loop_header_branch
    %12 = sbr.rel (%p10) target = $region8
  $region5: #{tpu_custom_call.1} parent=0 // loop_body
    %s14 = ssub.s32 %s9, 1
    %s15 = ssub.s32 %s9, 2
    %s16 = sadd.s32 %s9, 1
    %s17 = ssub.s32 %s9, %s16
    %p18 = scmp.eq.s32.totalorder %s17, 0
    %s20 = sadd.s32 %s19, 1
    %s21 = scalar_select %p18, %s19, %s20
    %p24 = pneg %p18
    %p25 = scmp.eq.s32.totalorder %s9, 1
    %p26 = por %p24, %p25
    %p27 = scmp.ne.s32.totalorder %s19, %s22
    %p28 = scmp.eq.s32.totalorder %s9, 0
    %p29 = por %p27, %p28
    %p30 = scmp.ne.s32.totalorder %s19, %s22
    %p31 = scmp.eq.s32.totalorder %s14, 1
    %p32 = por %p30, %p31
    %p33 = scmp.ne.s32.totalorder %s22, %s23
    %p34 = scmp.eq.s32.totalorder %s14, 0
    %p35 = por %p33, %p34
    %p36 = scmp.ne.s32.totalorder %s22, %s23
    %p37 = scmp.eq.s32.totalorder %s15, 1
    %p38 = por %p36, %p37
    %p40 = scmp.ne.s32.totalorder %s23, %s39
    %p41 = scmp.eq.s32.totalorder %s15, 0
    %p42 = por %p40, %p41
    %s44 = sadd.s32 %s43, 1
    %p47 = scmp.eq.s32.totalorder %s9, 1
    %p48 = scmp.ne.s32.totalorder %s43, %s45
    %p49 = scmp.eq.s32.totalorder %s9, 0
    %p50 = por %p48, %p49
    %p51 = scmp.ne.s32.totalorder %s43, %s45
    %p52 = scmp.eq.s32.totalorder %s14, 1
    %p53 = por %p51, %p52
    %p54 = scmp.ne.s32.totalorder %s45, %s46
    %p55 = scmp.eq.s32.totalorder %s14, 0
    %p56 = por %p54, %p55
    %p57 = scmp.ne.s32.totalorder %s45, %s46
    %p58 = scmp.eq.s32.totalorder %s15, 1
    %p59 = por %p57, %p58
    %p61 = scmp.ne.s32.totalorder %s46, %s60
    %p62 = scmp.eq.s32.totalorder %s15, 0
    %p63 = por %p61, %p62
    %s65 = sadd.s32 %s64, 1
    %p68 = scmp.eq.s32.totalorder %s9, 1
    %p69 = scmp.ne.s32.totalorder %s64, %s66
    %p70 = scmp.eq.s32.totalorder %s9, 0
    %p71 = por %p69, %p70
    %p72 = scmp.ne.s32.totalorder %s64, %s66
    %p73 = scmp.eq.s32.totalorder %s14, 1
    %p74 = por %p72, %p73
    %p75 = scmp.ne.s32.totalorder %s66, %s67
    %p76 = scmp.eq.s32.totalorder %s14, 0
    %p77 = por %p75, %p76
    %p78 = scmp.ne.s32.totalorder %s66, %s67
    %p79 = scmp.eq.s32.totalorder %s15, 1
    %p80 = por %p78, %p79
    %p82 = scmp.ne.s32.totalorder %s67, %s81
    %p83 = scmp.eq.s32.totalorder %s15, 0
    %p84 = por %p82, %p83
    %s85 = ssub.s32 %s9, %s16
    %p86 = scmp.eq.s32.totalorder %s85, 0
    %s88 = sadd.s32 %s87, 1
    %s89 = scalar_select %p86, %s87, %s88
    %p92 = pneg %p86
    %p93 = scmp.eq.s32.totalorder %s9, 1
    %p94 = por %p92, %p93
    %p95 = scmp.ne.s32.totalorder %s87, %s90
    %p96 = scmp.eq.s32.totalorder %s9, 0
    %p97 = por %p95, %p96
    %p98 = scmp.ne.s32.totalorder %s87, %s90
    %p99 = scmp.eq.s32.totalorder %s14, 1
    %p100 = por %p98, %p99
    %p101 = scmp.ne.s32.totalorder %s90, %s91
    %p102 = scmp.eq.s32.totalorder %s14, 0
    %p103 = por %p101, %p102
    %p104 = scmp.ne.s32.totalorder %s90, %s91
    %p105 = scmp.eq.s32.totalorder %s15, 1
    %p106 = por %p104, %p105
    %p108 = scmp.ne.s32.totalorder %s91, %s107
    %p109 = scmp.eq.s32.totalorder %s15, 0
    %p110 = por %p108, %p109
    %p111 = scmp.le.s32.totalorder 1, %s9
    %p112 = scmp.lt.s32.totalorder %s9, 3
    %p113 = pnand %p111, %p112
    %p114 = pneg %p113
    // Predicated region
    $region9: #{tpu_custom_call.1} parent=5 // pred_check
      _
    $region10: #{tpu_custom_call.1} parent=5 // pred_check_branch
      %116 = sbr.rel (%p113) target = $region12
    $region11: #{tpu_custom_call.1} parent=5 // pred_region
      %s117 = ssub.s32 %s9, 1
      // Predicated region
      $region13: #{tpu_custom_call.1} parent=11 // pred_check
        %p118 = pneg %p56
      $region14: #{tpu_custom_call.1} parent=11 // pred_check_branch
        %120 = sbr.rel (%p118) target = $region16
      $region15: #{tpu_custom_call.1} parent=11 // pred_region
        _
      $region16: #{tpu_custom_call.1} parent=11 // pred_fallthru
        _
      // Predicated region
      $region17: #{tpu_custom_call.1} parent=11 // pred_check
        %p121 = pneg %p77
      $region18: #{tpu_custom_call.1} parent=11 // pred_check_branch
        %123 = sbr.rel (%p121) target = $region20
      $region19: #{tpu_custom_call.1} parent=11 // pred_region
        _
      $region20: #{tpu_custom_call.1} parent=11 // pred_fallthru
        _
    $region12: #{tpu_custom_call.1} parent=5 // pred_fallthru
      _
    %p124 = scmp.lt.s32.totalorder %s9, 2
    // Predicated region
    $region21: #{tpu_custom_call.1} parent=5 // pred_check
      %p125 = pneg %p124
    $region22: #{tpu_custom_call.1} parent=5 // pred_check_branch
      %127 = sbr.rel (%p125) target = $region24
    $region23: #{tpu_custom_call.1} parent=5 // pred_region
      // Predicated region
      $region25: #{tpu_custom_call.1} parent=23 // pred_check
        %p128 = pneg %p29
      $region26: #{tpu_custom_call.1} parent=23 // pred_check_branch
        %130 = sbr.rel (%p128) target = $region28
      $region27: #{tpu_custom_call.1} parent=23 // pred_region
        %s131 = smul.u32 64, %s9
        %p132 = scmp.lt.s32.totalorder %s131, 127
        %s133 = scalar_select %p132, %s131, 127
        %s134 = smul.addr %s133, 4
        %s135 = scalar_lea.vmem %s0, %s134
        %s136 = smul.u32 64, %s9
      $region28: #{tpu_custom_call.1} parent=23 // pred_fallthru
        _
    $region24: #{tpu_custom_call.1} parent=5 // pred_fallthru
      _
    %p137 = scmp.le.s32.totalorder 1, %s9
    %p138 = scmp.lt.s32.totalorder %s9, 3
    %p139 = pnand %p137, %p138
    %p140 = pneg %p139
    // Predicated region
    $region29: #{tpu_custom_call.1} parent=5 // pred_check
      _
    $region30: #{tpu_custom_call.1} parent=5 // pred_check_branch
      %142 = sbr.rel (%p139) target = $region32
    $region31: #{tpu_custom_call.1} parent=5 // pred_region
      %s143 = ssub.s32 %s9, 1
      %s144 = smul.u32 64, %s14
      %p145 = scmp.lt.s32.totalorder %s144, 127
      %s146 = scalar_select %p145, %s144, 127
      %s147 = smul.addr %s146, 4
      %s148 = scalar_lea.vmem %s0, %s147
      %p149 = pneg %p35
      %p150 = pneg %p32
      %p151 = pneg %p56
      %p152 = pneg %p53
      %p153 = pneg %p77
      %p154 = pneg %p74
      %p155 = pneg %p103
      %p156 = pneg %p100
      %s157 = smul.u32 64, %s14
      %p158 = scmp.lt.s32.totalorder %s157, 127
      %s159 = scalar_select %p158, %s157, 127
      %s160 = smul.addr %s159, 8
      %s161 = scalar_lea.vmem %s3, %s160
      %s162 = smul.u32 64, %s14
      %p163 = scmp.lt.s32.totalorder %s162, 127
      %s164 = scalar_select %p163, %s162, 127
      %s165 = smul.addr %s164, 4
      %s166 = scalar_lea.vmem %s0, %s165
      %s167 = smul.u32 64, %s14
      %s168 = smul.u32 64, %s14
      %p169 = scmp.lt.s32.totalorder %s168, 127
      %s170 = scalar_select %p169, %s168, 127
      %s171 = smul.addr %s170, 8
      %s172 = scalar_lea.vmem %s3, %s171
      %s173 = smul.u32 64, %s14
      %v175 = vld [vmem:[%s166] sm:$0xf]
      %v176 = vld [vmem:[%s166 + $0x4] sm:$0xf]
      %v177 = vld [vmem:[%s166 + $0x8] sm:$0xf]
      %v178 = vld [vmem:[%s166 + $0xc] sm:$0xf]
      %v179 = vld [vmem:[%s166 + $0x10] sm:$0xf]
      %v180 = vld [vmem:[%s166 + $0x14] sm:$0xf]
      %v181 = vld [vmem:[%s166 + $0x18] sm:$0xf]
      %v182 = vld [vmem:[%s166 + $0x1c] sm:$0xf]
      %v183 = vld [vmem:[%s166 + $0x20] sm:$0xf]
      %v184 = vld [vmem:[%s166 + $0x24] sm:$0xf]
      %v185 = vld [vmem:[%s166 + $0x28] sm:$0xf]
      %v186 = vld [vmem:[%s166 + $0x2c] sm:$0xf]
      %v187 = vld [vmem:[%s166 + $0x30] sm:$0xf]
      %v188 = vld [vmem:[%s166 + $0x34] sm:$0xf]
      %v189 = vld [vmem:[%s166 + $0x38] sm:$0xf]
      %v190 = vld [vmem:[%s166 + $0x3c] sm:$0xf]
      %v191 = vld [vmem:[%s166 + $0x40] sm:$0xf]
      %v192 = vld [vmem:[%s166 + $0x44] sm:$0xf]
      %v193 = vld [vmem:[%s166 + $0x48] sm:$0xf]
      %v194 = vld [vmem:[%s166 + $0x4c] sm:$0xf]
      %v195 = vld [vmem:[%s166 + $0x50] sm:$0xf]
      %v196 = vld [vmem:[%s166 + $0x54] sm:$0xf]
      %v197 = vld [vmem:[%s166 + $0x58] sm:$0xf]
      %v198 = vld [vmem:[%s166 + $0x5c] sm:$0xf]
      %v199 = vld [vmem:[%s166 + $0x60] sm:$0xf]
      %v200 = vld [vmem:[%s166 + $0x64] sm:$0xf]
      %v201 = vld [vmem:[%s166 + $0x68] sm:$0xf]
      %v202 = vld [vmem:[%s166 + $0x6c] sm:$0xf]
      %v203 = vld [vmem:[%s166 + $0x70] sm:$0xf]
      %v204 = vld [vmem:[%s166 + $0x74] sm:$0xf]
      %v205 = vld [vmem:[%s166 + $0x78] sm:$0xf]
      %v206 = vld [vmem:[%s166 + $0x7c] sm:$0xf]
      %v207 = vld [vmem:[%s166 + $0x80] sm:$0xf]
      %v208 = vld [vmem:[%s166 + $0x84] sm:$0xf]
      %v209 = vld [vmem:[%s166 + $0x88] sm:$0xf]
      %v210 = vld [vmem:[%s166 + $0x8c] sm:$0xf]
      %v211 = vld [vmem:[%s166 + $0x90] sm:$0xf]
      %v212 = vld [vmem:[%s166 + $0x94] sm:$0xf]
      %v213 = vld [vmem:[%s166 + $0x98] sm:$0xf]
      %v214 = vld [vmem:[%s166 + $0x9c] sm:$0xf]
      %v215 = vld [vmem:[%s166 + $0xa0] sm:$0xf]
      %v216 = vld [vmem:[%s166 + $0xa4] sm:$0xf]
      %v217 = vld [vmem:[%s166 + $0xa8] sm:$0xf]
      %v218 = vld [vmem:[%s166 + $0xac] sm:$0xf]
      %v219 = vld [vmem:[%s166 + $0xb0] sm:$0xf]
      %v220 = vld [vmem:[%s166 + $0xb4] sm:$0xf]
      %v221 = vld [vmem:[%s166 + $0xb8] sm:$0xf]
      %v222 = vld [vmem:[%s166 + $0xbc] sm:$0xf]
      %v223 = vld [vmem:[%s166 + $0xc0] sm:$0xf]
      %v224 = vld [vmem:[%s166 + $0xc4] sm:$0xf]
      %v225 = vld [vmem:[%s166 + $0xc8] sm:$0xf]
      %v226 = vld [vmem:[%s166 + $0xcc] sm:$0xf]
      %v227 = vld [vmem:[%s166 + $0xd0] sm:$0xf]
      %v228 = vld [vmem:[%s166 + $0xd4] sm:$0xf]
      %v229 = vld [vmem:[%s166 + $0xd8] sm:$0xf]
      %v230 = vld [vmem:[%s166 + $0xdc] sm:$0xf]
      %v231 = vld [vmem:[%s166 + $0xe0] sm:$0xf]
      %v232 = vld [vmem:[%s166 + $0xe4] sm:$0xf]
      %v233 = vld [vmem:[%s166 + $0xe8] sm:$0xf]
      %v234 = vld [vmem:[%s166 + $0xec] sm:$0xf]
      %v235 = vld [vmem:[%s166 + $0xf0] sm:$0xf]
      %v236 = vld [vmem:[%s166 + $0xf4] sm:$0xf]
      %v237 = vld [vmem:[%s166 + $0xf8] sm:$0xf]
      %v238 = vld [vmem:[%s166 + $0xfc] sm:$0xf]
      %v239 = vld [vmem:[%s1] sm:$0xf]
      %v240 = vld [vmem:[%s2] sm:$0x1]
      %v242 = vperm.slane %v240, 0
      %v308 = vunpack.c.l.b16 %v175
      %v309 = vunpack.c.l.b16 %v176
      %v310 = vunpack.c.l.b16 %v177
      %v311 = vunpack.c.l.b16 %v178
      %v312 = vunpack.c.l.b16 %v179
      %v313 = vunpack.c.l.b16 %v180
      %v314 = vunpack.c.l.b16 %v181
      %v315 = vunpack.c.l.b16 %v182
      %v316 = vunpack.c.l.b16 %v183
      %v317 = vunpack.c.l.b16 %v184
      %v318 = vunpack.c.l.b16 %v185
      %v319 = vunpack.c.l.b16 %v186
      %v320 = vunpack.c.l.b16 %v187
      %v321 = vunpack.c.l.b16 %v188
      %v322 = vunpack.c.l.b16 %v189
      %v323 = vunpack.c.l.b16 %v190
      %v324 = vunpack.c.l.b16 %v191
      %v325 = vunpack.c.l.b16 %v192
      %v326 = vunpack.c.l.b16 %v193
      %v327 = vunpack.c.l.b16 %v194
      %v328 = vunpack.c.l.b16 %v195
      %v329 = vunpack.c.l.b16 %v196
      %v330 = vunpack.c.l.b16 %v197
      %v331 = vunpack.c.l.b16 %v198
      %v332 = vunpack.c.l.b16 %v199
      %v333 = vunpack.c.l.b16 %v200
      %v334 = vunpack.c.l.b16 %v201
      %v335 = vunpack.c.l.b16 %v202
      %v336 = vunpack.c.l.b16 %v203
      %v337 = vunpack.c.l.b16 %v204
      %v338 = vunpack.c.l.b16 %v205
      %v339 = vunpack.c.l.b16 %v206
      %v340 = vunpack.c.l.b16 %v207
      %v341 = vunpack.c.l.b16 %v208
      %v342 = vunpack.c.l.b16 %v209
      %v343 = vunpack.c.l.b16 %v210
      %v344 = vunpack.c.l.b16 %v211
      %v345 = vunpack.c.l.b16 %v212
      %v346 = vunpack.c.l.b16 %v213
      %v347 = vunpack.c.l.b16 %v214
      %v348 = vunpack.c.l.b16 %v215
      %v349 = vunpack.c.l.b16 %v216
      %v350 = vunpack.c.l.b16 %v217
      %v351 = vunpack.c.l.b16 %v218
      %v352 = vunpack.c.l.b16 %v219
      %v353 = vunpack.c.l.b16 %v220
      %v354 = vunpack.c.l.b16 %v221
      %v355 = vunpack.c.l.b16 %v222
      %v356 = vunpack.c.l.b16 %v223
      %v357 = vunpack.c.l.b16 %v224
      %v358 = vunpack.c.l.b16 %v225
      %v359 = vunpack.c.l.b16 %v226
      %v360 = vunpack.c.l.b16 %v227
      %v361 = vunpack.c.l.b16 %v228
      %v362 = vunpack.c.l.b16 %v229
      %v363 = vunpack.c.l.b16 %v230
      %v364 = vunpack.c.l.b16 %v231
      %v365 = vunpack.c.l.b16 %v232
      %v366 = vunpack.c.l.b16 %v233
      %v367 = vunpack.c.l.b16 %v234
      %v368 = vunpack.c.l.b16 %v235
      %v369 = vunpack.c.l.b16 %v236
      %v370 = vunpack.c.l.b16 %v237
      %v371 = vunpack.c.l.b16 %v238
      %v372 = vpack.c.b16 %v309, %v308
      %v373 = vpack.c.b16 %v311, %v310
      %v374 = vpack.c.b16 %v313, %v312
      %v375 = vpack.c.b16 %v315, %v314
      %v376 = vpack.c.b16 %v317, %v316
      %v377 = vpack.c.b16 %v319, %v318
      %v378 = vpack.c.b16 %v321, %v320
      %v379 = vpack.c.b16 %v323, %v322
      %v380 = vpack.c.b16 %v325, %v324
      %v381 = vpack.c.b16 %v327, %v326
      %v382 = vpack.c.b16 %v329, %v328
      %v383 = vpack.c.b16 %v331, %v330
      %v384 = vpack.c.b16 %v333, %v332
      %v385 = vpack.c.b16 %v335, %v334
      %v386 = vpack.c.b16 %v337, %v336
      %v387 = vpack.c.b16 %v339, %v338
      %v388 = vpack.c.b16 %v341, %v340
      %v389 = vpack.c.b16 %v343, %v342
      %v390 = vpack.c.b16 %v345, %v344
      %v391 = vpack.c.b16 %v347, %v346
      %v392 = vpack.c.b16 %v349, %v348
      %v393 = vpack.c.b16 %v351, %v350
      %v394 = vpack.c.b16 %v353, %v352
      %v395 = vpack.c.b16 %v355, %v354
      %v396 = vpack.c.b16 %v357, %v356
      %v397 = vpack.c.b16 %v359, %v358
      %v398 = vpack.c.b16 %v361, %v360
      %v399 = vpack.c.b16 %v363, %v362
      %v400 = vpack.c.b16 %v365, %v364
      %v401 = vpack.c.b16 %v367, %v366
      %v402 = vpack.c.b16 %v369, %v368
      %v403 = vpack.c.b16 %v371, %v370
      %vm404 = vcmask 64512
      %v406 = vsel %vm404, %v372, 0
      %v409 = vsel %vm404, %v373, 0
      %v412 = vsel %vm404, %v374, 0
      %v415 = vsel %vm404, %v375, 0
      %v418 = vsel %vm404, %v376, 0
      %v421 = vsel %vm404, %v377, 0
      %v424 = vsel %vm404, %v378, 0
      %v427 = vsel %vm404, %v379, 0
      %v430 = vsel %vm404, %v380, 0
      %v433 = vsel %vm404, %v381, 0
      %v436 = vsel %vm404, %v382, 0
      %v439 = vsel %vm404, %v383, 0
      %v442 = vsel %vm404, %v384, 0
      %v445 = vsel %vm404, %v385, 0
      %v448 = vsel %vm404, %v386, 0
      %v451 = vsel %vm404, %v387, 0
      %v454 = vsel %vm404, %v388, 0
      %v457 = vsel %vm404, %v389, 0
      %v460 = vsel %vm404, %v390, 0
      %v463 = vsel %vm404, %v391, 0
      %v466 = vsel %vm404, %v392, 0
      %v469 = vsel %vm404, %v393, 0
      %v472 = vsel %vm404, %v394, 0
      %v475 = vsel %vm404, %v395, 0
      %v478 = vsel %vm404, %v396, 0
      %v481 = vsel %vm404, %v397, 0
      %v484 = vsel %vm404, %v398, 0
      %v487 = vsel %vm404, %v399, 0
      %v490 = vsel %vm404, %v400, 0
      %v493 = vsel %vm404, %v401, 0
      %v496 = vsel %vm404, %v402, 0
      %v499 = vsel %vm404, %v403, 0
      %vm501 = vcmask 1043456
      %v503 = vsel %vm501, %v239, 0
      %505 = vmatpush.bf16.msra.mxu0 0
      %506 = vmatpush.bf16.msra.mxu0 0
      %507 = vmatpush.bf16.msra.mxu0 0
      %508 = vmatpush.bf16.msra.mxu0 0
      %509 = vmatpush.bf16.msra.mxu0 0
      %510 = vmatpush.bf16.msra.mxu0 0
      %511 = vmatpush.bf16.msra.mxu0 0
      %512 = vmatpush.bf16.msra.mxu0 %v503
      %513 = vmatmul.bf16.gmra.mxu0 %v406
      %v514 = vpop.f32.mrf.mxu0
      %v515 = vadd.f32 %v242, %v514
      %v516 = vpop.f32.mrf.mxu0
      %v517 = vadd.f32 %v242, %v516
      %518 = vmatmul.bf16.gmra.mxu0 %v409
      %v519 = vpop.f32.mrf.mxu0
      %v520 = vadd.f32 %v242, %v519
      %v521 = vpop.f32.mrf.mxu0
      %v522 = vadd.f32 %v242, %v521
      %523 = vmatmul.bf16.gmra.mxu0 %v412
      %v524 = vpop.f32.mrf.mxu0
      %v525 = vadd.f32 %v242, %v524
      %v526 = vpop.f32.mrf.mxu0
      %v527 = vadd.f32 %v242, %v526
      %528 = vmatmul.bf16.gmra.mxu0 %v415
      %v529 = vpop.f32.mrf.mxu0
      %v530 = vadd.f32 %v242, %v529
      %v531 = vpop.f32.mrf.mxu0
      %v532 = vadd.f32 %v242, %v531
      %533 = vmatmul.bf16.gmra.mxu0 %v418
      %v534 = vpop.f32.mrf.mxu0
      %v535 = vadd.f32 %v242, %v534
      %v536 = vpop.f32.mrf.mxu0
      %v537 = vadd.f32 %v242, %v536
      %538 = vmatmul.bf16.gmra.mxu0 %v421
      %v539 = vpop.f32.mrf.mxu0
      %v540 = vadd.f32 %v242, %v539
      %v541 = vpop.f32.mrf.mxu0
      %v542 = vadd.f32 %v242, %v541
      %543 = vmatmul.bf16.gmra.mxu0 %v424
      %v544 = vpop.f32.mrf.mxu0
      %v545 = vadd.f32 %v242, %v544
      %v546 = vpop.f32.mrf.mxu0
      %v547 = vadd.f32 %v242, %v546
      %548 = vmatmul.bf16.gmra.mxu0 %v427
      %v549 = vpop.f32.mrf.mxu0
      %v550 = vadd.f32 %v242, %v549
      %v551 = vpop.f32.mrf.mxu0
      %v552 = vadd.f32 %v242, %v551
      %553 = vmatmul.bf16.gmra.mxu0 %v430
      %v554 = vpop.f32.mrf.mxu0
      %v555 = vadd.f32 %v242, %v554
      %v556 = vpop.f32.mrf.mxu0
      %v557 = vadd.f32 %v242, %v556
      %558 = vmatmul.bf16.gmra.mxu0 %v433
      %v559 = vpop.f32.mrf.mxu0
      %v560 = vadd.f32 %v242, %v559
      %v561 = vpop.f32.mrf.mxu0
      %v562 = vadd.f32 %v242, %v561
      %563 = vmatmul.bf16.gmra.mxu0 %v436
      %v564 = vpop.f32.mrf.mxu0
      %v565 = vadd.f32 %v242, %v564
      %v566 = vpop.f32.mrf.mxu0
      %v567 = vadd.f32 %v242, %v566
      %568 = vmatmul.bf16.gmra.mxu0 %v439
      %v569 = vpop.f32.mrf.mxu0
      %v570 = vadd.f32 %v242, %v569
      %v571 = vpop.f32.mrf.mxu0
      %v572 = vadd.f32 %v242, %v571
      %573 = vmatmul.bf16.gmra.mxu0 %v442
      %v574 = vpop.f32.mrf.mxu0
      %v575 = vadd.f32 %v242, %v574
      %v576 = vpop.f32.mrf.mxu0
      %v577 = vadd.f32 %v242, %v576
      %578 = vmatmul.bf16.gmra.mxu0 %v445
      %v579 = vpop.f32.mrf.mxu0
      %v580 = vadd.f32 %v242, %v579
      %v581 = vpop.f32.mrf.mxu0
      %v582 = vadd.f32 %v242, %v581
      %583 = vmatmul.bf16.gmra.mxu0 %v448
      %v584 = vpop.f32.mrf.mxu0
      %v585 = vadd.f32 %v242, %v584
      %v586 = vpop.f32.mrf.mxu0
      %v587 = vadd.f32 %v242, %v586
      %588 = vmatmul.bf16.gmra.mxu0 %v451
      %v589 = vpop.f32.mrf.mxu0
      %v590 = vadd.f32 %v242, %v589
      %v591 = vpop.f32.mrf.mxu0
      %v592 = vadd.f32 %v242, %v591
      %593 = vmatmul.bf16.gmra.mxu0 %v454
      %v594 = vpop.f32.mrf.mxu0
      %v595 = vadd.f32 %v242, %v594
      %v596 = vpop.f32.mrf.mxu0
      %v597 = vadd.f32 %v242, %v596
      %598 = vmatmul.bf16.gmra.mxu0 %v457
      %v599 = vpop.f32.mrf.mxu0
      %v600 = vadd.f32 %v242, %v599
      %v601 = vpop.f32.mrf.mxu0
      %v602 = vadd.f32 %v242, %v601
      %603 = vmatmul.bf16.gmra.mxu0 %v460
      %v604 = vpop.f32.mrf.mxu0
      %v605 = vadd.f32 %v242, %v604
      %v606 = vpop.f32.mrf.mxu0
      %v607 = vadd.f32 %v242, %v606
      %608 = vmatmul.bf16.gmra.mxu0 %v463
      %v609 = vpop.f32.mrf.mxu0
      %v610 = vadd.f32 %v242, %v609
      %v611 = vpop.f32.mrf.mxu0
      %v612 = vadd.f32 %v242, %v611
      %613 = vmatmul.bf16.gmra.mxu0 %v466
      %v614 = vpop.f32.mrf.mxu0
      %v615 = vadd.f32 %v242, %v614
      %v616 = vpop.f32.mrf.mxu0
      %v617 = vadd.f32 %v242, %v616
      %618 = vmatmul.bf16.gmra.mxu0 %v469
      %v619 = vpop.f32.mrf.mxu0
      %v620 = vadd.f32 %v242, %v619
      %v621 = vpop.f32.mrf.mxu0
      %v622 = vadd.f32 %v242, %v621
      %623 = vmatmul.bf16.gmra.mxu0 %v472
      %v624 = vpop.f32.mrf.mxu0
      %v625 = vadd.f32 %v242, %v624
      %v626 = vpop.f32.mrf.mxu0
      %v627 = vadd.f32 %v242, %v626
      %628 = vmatmul.bf16.gmra.mxu0 %v475
      %v629 = vpop.f32.mrf.mxu0
      %v630 = vadd.f32 %v242, %v629
      %v631 = vpop.f32.mrf.mxu0
      %v632 = vadd.f32 %v242, %v631
      %633 = vmatmul.bf16.gmra.mxu0 %v478
      %v634 = vpop.f32.mrf.mxu0
      %v635 = vadd.f32 %v242, %v634
      %v636 = vpop.f32.mrf.mxu0
      %v637 = vadd.f32 %v242, %v636
      %638 = vmatmul.bf16.gmra.mxu0 %v481
      %v639 = vpop.f32.mrf.mxu0
      %v640 = vadd.f32 %v242, %v639
      %v641 = vpop.f32.mrf.mxu0
      %v642 = vadd.f32 %v242, %v641
      %643 = vmatmul.bf16.gmra.mxu0 %v484
      %v644 = vpop.f32.mrf.mxu0
      %v645 = vadd.f32 %v242, %v644
      %v646 = vpop.f32.mrf.mxu0
      %v647 = vadd.f32 %v242, %v646
      %648 = vmatmul.bf16.gmra.mxu0 %v487
      %v649 = vpop.f32.mrf.mxu0
      %v650 = vadd.f32 %v242, %v649
      %v651 = vpop.f32.mrf.mxu0
      %v652 = vadd.f32 %v242, %v651
      %653 = vmatmul.bf16.gmra.mxu0 %v490
      %v654 = vpop.f32.mrf.mxu0
      %v655 = vadd.f32 %v242, %v654
      %v656 = vpop.f32.mrf.mxu0
      %v657 = vadd.f32 %v242, %v656
      %658 = vmatmul.bf16.gmra.mxu0 %v493
      %v659 = vpop.f32.mrf.mxu0
      %v660 = vadd.f32 %v242, %v659
      %v661 = vpop.f32.mrf.mxu0
      %v662 = vadd.f32 %v242, %v661
      %663 = vmatmul.bf16.gmra.mxu0 %v496
      %v664 = vpop.f32.mrf.mxu0
      %v665 = vadd.f32 %v242, %v664
      %v666 = vpop.f32.mrf.mxu0
      %v667 = vadd.f32 %v242, %v666
      %668 = vmatmul.bf16.gmra.mxu0 %v499
      %v669 = vpop.f32.mrf.mxu0
      %v670 = vadd.f32 %v242, %v669
      %v671 = vpop.f32.mrf.mxu0
      %v672 = vadd.f32 %v242, %v671
      %673 = vdwg.mxu0
      %vm674 = vcmask 261120
      %675 = vst.msk [vmem:[%s172] sm:$0xff] %vm674, %v515
      %676 = vst.msk [vmem:[%s172 + $0x8] sm:$0xff] %vm674, %v517
      %677 = vst.msk [vmem:[%s172 + $0x10] sm:$0xff] %vm674, %v520
      %678 = vst.msk [vmem:[%s172 + $0x18] sm:$0xff] %vm674, %v522
      %679 = vst.msk [vmem:[%s172 + $0x20] sm:$0xff] %vm674, %v525
      %680 = vst.msk [vmem:[%s172 + $0x28] sm:$0xff] %vm674, %v527
      %681 = vst.msk [vmem:[%s172 + $0x30] sm:$0xff] %vm674, %v530
      %682 = vst.msk [vmem:[%s172 + $0x38] sm:$0xff] %vm674, %v532
      %683 = vst.msk [vmem:[%s172 + $0x40] sm:$0xff] %vm674, %v535
      %684 = vst.msk [vmem:[%s172 + $0x48] sm:$0xff] %vm674, %v537
      %685 = vst.msk [vmem:[%s172 + $0x50] sm:$0xff] %vm674, %v540
      %686 = vst.msk [vmem:[%s172 + $0x58] sm:$0xff] %vm674, %v542
      %687 = vst.msk [vmem:[%s172 + $0x60] sm:$0xff] %vm674, %v545
      %688 = vst.msk [vmem:[%s172 + $0x68] sm:$0xff] %vm674, %v547
      %689 = vst.msk [vmem:[%s172 + $0x70] sm:$0xff] %vm674, %v550
      %690 = vst.msk [vmem:[%s172 + $0x78] sm:$0xff] %vm674, %v552
      %691 = vst.msk [vmem:[%s172 + $0x80] sm:$0xff] %vm674, %v555
      %692 = vst.msk [vmem:[%s172 + $0x88] sm:$0xff] %vm674, %v557
      %693 = vst.msk [vmem:[%s172 + $0x90] sm:$0xff] %vm674, %v560
      %694 = vst.msk [vmem:[%s172 + $0x98] sm:$0xff] %vm674, %v562
      %695 = vst.msk [vmem:[%s172 + $0xa0] sm:$0xff] %vm674, %v565
      %696 = vst.msk [vmem:[%s172 + $0xa8] sm:$0xff] %vm674, %v567
      %697 = vst.msk [vmem:[%s172 + $0xb0] sm:$0xff] %vm674, %v570
      %698 = vst.msk [vmem:[%s172 + $0xb8] sm:$0xff] %vm674, %v572
      %699 = vst.msk [vmem:[%s172 + $0xc0] sm:$0xff] %vm674, %v575
      %700 = vst.msk [vmem:[%s172 + $0xc8] sm:$0xff] %vm674, %v577
      %701 = vst.msk [vmem:[%s172 + $0xd0] sm:$0xff] %vm674, %v580
      %702 = vst.msk [vmem:[%s172 + $0xd8] sm:$0xff] %vm674, %v582
      %703 = vst.msk [vmem:[%s172 + $0xe0] sm:$0xff] %vm674, %v585
      %704 = vst.msk [vmem:[%s172 + $0xe8] sm:$0xff] %vm674, %v587
      %705 = vst.msk [vmem:[%s172 + $0xf0] sm:$0xff] %vm674, %v590
      %706 = vst.msk [vmem:[%s172 + $0xf8] sm:$0xff] %vm674, %v592
      %707 = vst.msk [vmem:[%s172 + $0x100] sm:$0xff] %vm674, %v595
      %708 = vst.msk [vmem:[%s172 + $0x108] sm:$0xff] %vm674, %v597
      %709 = vst.msk [vmem:[%s172 + $0x110] sm:$0xff] %vm674, %v600
      %710 = vst.msk [vmem:[%s172 + $0x118] sm:$0xff] %vm674, %v602
      %711 = vst.msk [vmem:[%s172 + $0x120] sm:$0xff] %vm674, %v605
      %712 = vst.msk [vmem:[%s172 + $0x128] sm:$0xff] %vm674, %v607
      %713 = vst.msk [vmem:[%s172 + $0x130] sm:$0xff] %vm674, %v610
      %714 = vst.msk [vmem:[%s172 + $0x138] sm:$0xff] %vm674, %v612
      %715 = vst.msk [vmem:[%s172 + $0x140] sm:$0xff] %vm674, %v615
      %716 = vst.msk [vmem:[%s172 + $0x148] sm:$0xff] %vm674, %v617
      %717 = vst.msk [vmem:[%s172 + $0x150] sm:$0xff] %vm674, %v620
      %718 = vst.msk [vmem:[%s172 + $0x158] sm:$0xff] %vm674, %v622
      %719 = vst.msk [vmem:[%s172 + $0x160] sm:$0xff] %vm674, %v625
      %720 = vst.msk [vmem:[%s172 + $0x168] sm:$0xff] %vm674, %v627
      %721 = vst.msk [vmem:[%s172 + $0x170] sm:$0xff] %vm674, %v630
      %722 = vst.msk [vmem:[%s172 + $0x178] sm:$0xff] %vm674, %v632
      %723 = vst.msk [vmem:[%s172 + $0x180] sm:$0xff] %vm674, %v635
      %724 = vst.msk [vmem:[%s172 + $0x188] sm:$0xff] %vm674, %v637
      %725 = vst.msk [vmem:[%s172 + $0x190] sm:$0xff] %vm674, %v640
      %726 = vst.msk [vmem:[%s172 + $0x198] sm:$0xff] %vm674, %v642
      %727 = vst.msk [vmem:[%s172 + $0x1a0] sm:$0xff] %vm674, %v645
      %728 = vst.msk [vmem:[%s172 + $0x1a8] sm:$0xff] %vm674, %v647
      %729 = vst.msk [vmem:[%s172 + $0x1b0] sm:$0xff] %vm674, %v650
      %730 = vst.msk [vmem:[%s172 + $0x1b8] sm:$0xff] %vm674, %v652
      %731 = vst.msk [vmem:[%s172 + $0x1c0] sm:$0xff] %vm674, %v655
      %732 = vst.msk [vmem:[%s172 + $0x1c8] sm:$0xff] %vm674, %v657
      %733 = vst.msk [vmem:[%s172 + $0x1d0] sm:$0xff] %vm674, %v660
      %734 = vst.msk [vmem:[%s172 + $0x1d8] sm:$0xff] %vm674, %v662
      %735 = vst.msk [vmem:[%s172 + $0x1e0] sm:$0xff] %vm674, %v665
      %736 = vst.msk [vmem:[%s172 + $0x1e8] sm:$0xff] %vm674, %v667
      %737 = vst.msk [vmem:[%s172 + $0x1f0] sm:$0xff] %vm674, %v670
      %738 = vst.msk [vmem:[%s172 + $0x1f8] sm:$0xff] %vm674, %v672
      %s739 = smul.u32 64, %s14
      %p740 = scmp.lt.s32.totalorder %s739, 127
      %s741 = scalar_select %p740, %s739, 127
      %s742 = smul.addr %s741, 8
      %s743 = scalar_lea.vmem %s3, %s742
      // Predicated region
      $region33: #{tpu_custom_call.1} parent=31 // pred_check
        %p744 = pneg %p100
      $region34: #{tpu_custom_call.1} parent=31 // pred_check_branch
        %746 = sbr.rel (%p744) target = $region36
      $region35: #{tpu_custom_call.1} parent=31 // pred_region
        %s747 = smul.u32 64, %s14
      $region36: #{tpu_custom_call.1} parent=31 // pred_fallthru
        _
    $region32: #{tpu_custom_call.1} parent=5 // pred_fallthru
      _
    %p748 = scmp.le.s32.totalorder 2, %s9
    // Predicated region
    $region37: #{tpu_custom_call.1} parent=5 // pred_check
      %p749 = pneg %p748
    $region38: #{tpu_custom_call.1} parent=5 // pred_check_branch
      %751 = sbr.rel (%p749) target = $region40
    $region39: #{tpu_custom_call.1} parent=5 // pred_region
      %s752 = ssub.s32 %s9, 2
      // Predicated region
      $region41: #{tpu_custom_call.1} parent=39 // pred_check
        %p753 = pneg %p106
      $region42: #{tpu_custom_call.1} parent=39 // pred_check_branch
        %755 = sbr.rel (%p753) target = $region44
      $region43: #{tpu_custom_call.1} parent=39 // pred_region
        %s756 = smul.u32 64, %s15
        %p757 = scmp.lt.s32.totalorder %s756, 127
        %s758 = scalar_select %p757, %s756, 127
        %s759 = smul.addr %s758, 8
        %s760 = scalar_lea.vmem %s3, %s759
      $region44: #{tpu_custom_call.1} parent=39 // pred_fallthru
        _
    $region40: #{tpu_custom_call.1} parent=5 // pred_fallthru
      _
  $region6: #{tpu_custom_call.1} parent=0 // loop_footer
    %s13 = sadd.s32 1, %s9
  $region7: #{tpu_custom_call.1} parent=0 // loop_footer_branch
    %8 = sbr.rel target = $region3
  $region8: #{tpu_custom_call.1} parent=0 // loop_exit
    _

</llo_original>
